<compile_context>
chip_gen: v5e
topology: v5e:2x2
jax: 0.10.0
libtpu: 0.0.40
codegen_flags: <defaults>
</compile_context>

<pallas_src>
import functools

import jax
import jax.numpy as jnp
from jax.experimental import pallas as pl
from jax.experimental.pallas import tpu as pltpu


def _bn_kernel(x_ref, gamma_ref, beta_ref, o_ref, *, eps):
    # x_ref: (B, tn)   gamma_ref/beta_ref: (1, tn)   o_ref: (B, tn)
    x = x_ref[...].astype(jnp.float32)
    mean = jnp.mean(x, axis=0, keepdims=True)                 # (1, tn)
    centered = x - mean
    var = jnp.mean(centered * centered, axis=0, keepdims=True)  # biased (÷N), like torch training mode
    inv_std = jax.lax.rsqrt(var + eps)
    y = centered * inv_std * gamma_ref[...].astype(jnp.float32) \
        + beta_ref[...].astype(jnp.float32)
    o_ref[...] = y.astype(o_ref.dtype)


def _pick_feature_tile(batch, dim, itemsize=4, budget_bytes=8 * 1024 * 1024):
    """Largest lane-dense tile (multiple of 128) dividing dim that fits VMEM.

    Per-step footprint ~= (x block + out block) * double-buffer
                       = 4 * batch * tn * itemsize bytes.
    """
    for tn in (512, 256, 128):
        if dim % tn == 0 and 4 * batch * tn * itemsize <= budget_bytes:
            return tn
    return dim  # fall back to a single full-width block


def bn_forward(x, gamma, beta, eps=1e-5):
    """Equivalent of BN.forward: nn.BatchNorm1d(input_dim) in training mode.

    x     : (B, D) float32
    gamma : (D,)   float32  (BatchNorm weight)
    beta  : (D,)   float32  (BatchNorm bias)
    returns (B, D) float32
    """
    B, D = x.shape
    tn = _pick_feature_tile(B, D)
    gamma2 = gamma.reshape(1, D)
    beta2 = beta.reshape(1, D)

    kernel = functools.partial(_bn_kernel, eps=eps)

    return pl.pallas_call(
        kernel,
        out_shape=jax.ShapeDtypeStruct((B, D), x.dtype),
        grid_spec=pltpu.PrefetchScalarGridSpec(
            num_scalar_prefetch=0,
            grid=(D // tn,),
            in_specs=[
                pl.BlockSpec((B, tn), lambda j: (0, j)),
                pl.BlockSpec((1, tn), lambda j: (0, j)),
                pl.BlockSpec((1, tn), lambda j: (0, j)),
            ],
            out_specs=pl.BlockSpec((B, tn), lambda j: (0, j)),
        ),
        compiler_params=pltpu.CompilerParams(
            dimension_semantics=("parallel",),
        ),
    )(x, gamma2, beta2)


def init_bn_params(key, input_dim):
    # weights_init_kaiming for BatchNorm1d: weight ~ N(1.0, 0.02), bias = 0
    gamma = 1.0 + 0.02 * jax.random.normal(key, (input_dim,), jnp.float32)
    beta = jnp.zeros((input_dim,), jnp.float32)
    return gamma, beta


if __name__ == "__main__":
    # Small shapes consistent with the module: BatchNorm1d(input_dim=512)
    batch, input_dim = 16, 512
    eps = 1e-5

    key = jax.random.PRNGKey(0)
    x_key, p_key = jax.random.split(key)
    x = jax.random.normal(x_key, (batch, input_dim), jnp.float32)
    gamma, beta = init_bn_params(p_key, input_dim)

    out = bn_forward(x, gamma, beta, eps=eps)
    out = jax.block_until_ready(out)

    # Reference: torch BatchNorm1d training-mode forward (batch stats, biased var)
    mean = jnp.mean(x, axis=0, keepdims=True)
    var = jnp.mean((x - mean) ** 2, axis=0, keepdims=True)
    ref = (x - mean) / jnp.sqrt(var + eps) * gamma + beta

    assert out.shape == (batch, input_dim)
    assert jnp.allclose(out, ref, atol=1e-5, rtol=1e-5)

    print("KERNEL_OK")
</pallas_src>

<mosaic_0001>
module attributes {stable_mosaic.version = 11 : i64} {
  func.func @_bn_kernel(%arg0: i32, %arg1: memref<16x512xf32, #tpu.memory_space<vmem>>, %arg2: memref<1x512xf32, #tpu.memory_space<vmem>>, %arg3: memref<1x512xf32, #tpu.memory_space<vmem>>, %arg4: memref<16x512xf32, #tpu.memory_space<vmem>>) attributes {dimension_semantics = [#tpu.dimension_semantics<parallel>], iteration_bounds = array<i64: 1>, scalar_prefetch = 0 : i64, scratch_operands = 0 : i64, tpu.core_type = #tpu.core_type<tc>, window_params = [{transform_indices = @transform_0, window_bounds = array<i64: 16, 512>}, {transform_indices = @transform_1, window_bounds = array<i64: 1, 512>}, {transform_indices = @transform_2, window_bounds = array<i64: 1, 512>}, {transform_indices = @transform_3, window_bounds = array<i64: 16, 512>}]} {
    %c0 = arith.constant 0 : index
    %c0_0 = arith.constant 0 : index
    %0 = vector.load %arg1[%c0, %c0_0] : memref<16x512xf32, #tpu.memory_space<vmem>>, vector<16x512xf32>
    %cst = arith.constant dense<0.000000e+00> : vector<512xf32>
    %1 = vector.multi_reduction <add>, %0, %cst [0] : vector<16x512xf32> to vector<512xf32>
    %2 = vector.shape_cast %1 : vector<512xf32> to vector<1x512xf32>
    %cst_1 = arith.constant 1.600000e+01 : f32
    %3 = vector.broadcast %cst_1 : f32 to vector<1x512xf32>
    %4 = arith.divf %2, %3 : vector<1x512xf32>
    %5 = vector.broadcast %4 : vector<1x512xf32> to vector<16x512xf32>
    %6 = arith.subf %0, %5 : vector<16x512xf32>
    %7 = arith.mulf %6, %6 : vector<16x512xf32>
    %cst_2 = arith.constant dense<0.000000e+00> : vector<512xf32>
    %8 = vector.multi_reduction <add>, %7, %cst_2 [0] : vector<16x512xf32> to vector<512xf32>
    %9 = vector.shape_cast %8 : vector<512xf32> to vector<1x512xf32>
    %cst_3 = arith.constant 1.600000e+01 : f32
    %10 = vector.broadcast %cst_3 : f32 to vector<1x512xf32>
    %11 = arith.divf %9, %10 : vector<1x512xf32>
    %cst_4 = arith.constant 9.99999974E-6 : f32
    %12 = vector.broadcast %cst_4 : f32 to vector<1x512xf32>
    %13 = arith.addf %11, %12 : vector<1x512xf32>
    %14 = math.rsqrt %13 : vector<1x512xf32>
    %15 = vector.broadcast %14 : vector<1x512xf32> to vector<16x512xf32>
    %16 = arith.mulf %6, %15 : vector<16x512xf32>
    %c0_5 = arith.constant 0 : index
    %c0_6 = arith.constant 0 : index
    %17 = vector.load %arg2[%c0_5, %c0_6] : memref<1x512xf32, #tpu.memory_space<vmem>>, vector<1x512xf32>
    %18 = vector.broadcast %17 : vector<1x512xf32> to vector<16x512xf32>
    %19 = arith.mulf %16, %18 : vector<16x512xf32>
    %c0_7 = arith.constant 0 : index
    %c0_8 = arith.constant 0 : index
    %20 = vector.load %arg3[%c0_7, %c0_8] : memref<1x512xf32, #tpu.memory_space<vmem>>, vector<1x512xf32>
    %21 = vector.broadcast %20 : vector<1x512xf32> to vector<16x512xf32>
    %22 = arith.addf %19, %21 : vector<16x512xf32>
    %c0_9 = arith.constant 0 : index
    %c0_10 = arith.constant 0 : index
    %23 = vector.load %arg4[%c0_9, %c0_10] : memref<16x512xf32, #tpu.memory_space<vmem>>, vector<16x512xf32>
    tpu.vector_store %arg4[%c0_9, %c0_10], %22 {strides = array<i32>} : memref<16x512xf32, #tpu.memory_space<vmem>>, vector<16x512xf32>,
    return
  }
  func.func @transform_0(%arg0: i32) -> (i32, i32) {
    %c0_i32 = arith.constant 0 : i32
    %c0_i32_0 = arith.constant 0 : i32
    return %c0_i32, %arg0 : i32, i32
  }
  func.func @transform_1(%arg0: i32) -> (i32, i32) {
    %c0_i32 = arith.constant 0 : i32
    %c0_i32_0 = arith.constant 0 : i32
    return %c0_i32, %arg0 : i32, i32
  }
  func.func @transform_2(%arg0: i32) -> (i32, i32) {
    %c0_i32 = arith.constant 0 : i32
    %c0_i32_0 = arith.constant 0 : i32
    return %c0_i32, %arg0 : i32, i32
  }
  func.func @transform_3(%arg0: i32) -> (i32, i32) {
    %c0_i32 = arith.constant 0 : i32
    %c0_i32_0 = arith.constant 0 : i32
    return %c0_i32, %arg0 : i32, i32
  }
}

</mosaic_0001>

<llo_original>
// kernel: tpu_custom_call.1
$region0: #{tpu_custom_call.1}
  #allocation0 [shape = 'u32[]', space=smem, size = 0x4, offset = 0x4, fixed_abs, tag = 'smem constant byte address 0x4 - core index']
  #allocation1 [shape = 'u32[72,128]{1,0:T(1,128)}', space=vmem, size = 0x9000, scoped, tag = 'internal scratch']
  %s0 = inlined_call_operand.hbm [shape: f32[16,512], index: 0, kind: input, shape index: {}]
  %s1 = inlined_call_operand.hbm [shape: f32[1,512], index: 1, kind: input, shape index: {}]
  %s2 = inlined_call_operand.hbm [shape: f32[1,512], index: 2, kind: input, shape index: {}]
  %s3 = inlined_call_operand.hbm [shape: f32[16,512], index: 3, kind: output, shape index: {}]
  %s4 = sld [smem:[#allocation0]]
  $region34: #{tpu_custom_call.1} parent=0
    _
  %s6 = ssub.s32 1, %s4
  %s7 = scalar_select 0, %s6, %s4
  $region1: #{tpu_custom_call.1} parent=0
    #allocation2 [shape = 'u8[32768]{0}', space=vmem, size = 0x8000, scoped, tag = 'input window, operand 0, single buffered']
    #allocation3 [shape = 's32[1]{0}', space=sflag, size = 0x4, scoped, tag = 'scoped memory for tpu_custom_call.1']
    #allocation4 [shape = 's32[1]{0}', space=sflag, size = 0x4, scoped, tag = 'scoped memory for tpu_custom_call.1']
    #allocation5 [shape = 'u8[2048]{0}', space=vmem, size = 0x800, scoped, tag = 'input window, operand 1, single buffered']
    #allocation6 [shape = 's32[1]{0}', space=sflag, size = 0x4, scoped, tag = 'scoped memory for tpu_custom_call.1']
    #allocation7 [shape = 'u8[2048]{0}', space=vmem, size = 0x800, scoped, tag = 'input window, operand 2, single buffered']
    #allocation8 [shape = 'u8[32768]{0}', space=vmem, size = 0x8000, scoped, tag = 'output window, operand 0, single buffered']
    %8 = vsyncpa [#allocation3], 0
    %9 = vsyncpa [#allocation6], 0
    %10 = vsyncpa [#allocation4], 0
    // Predicated region
    $region2: #{tpu_custom_call.1} parent=1 // pred_check
      _
    $region3: #{tpu_custom_call.1} parent=1 // pred_check_branch
      %12 = sbr.rel (0) target = $region5
    $region4: #{tpu_custom_call.1} parent=1 // pred_region
      %14 = vsyncadd [#allocation3], 0
      %s15 = sshll.u32 %s0, 4
      %s16 = int_to_ptr.hbm [resolvable:$true] %s15
      %s17 = sshll.u32 [#allocation2], 4
      %s18 = int_to_ptr.vmem [resolvable:$true] %s17
      %23 = dma.hbm_to_vmem [thread:$0]  %s16, 1024, %s18, [#allocation3], 512, 512, 32
    $region5: #{tpu_custom_call.1} parent=1 // pred_fallthru
      _
    // Predicated region
    $region6: #{tpu_custom_call.1} parent=1 // pred_check
      _
    $region7: #{tpu_custom_call.1} parent=1 // pred_check_branch
      %25 = sbr.rel (0) target = $region9
    $region8: #{tpu_custom_call.1} parent=1 // pred_region
      %27 = vsyncadd [#allocation6], 0
      %s29 = sshll.u32 %s1, 4
      %s30 = int_to_ptr.hbm [resolvable:$true] %s29
      %s31 = sshll.u32 [#allocation5], 4
      %s32 = int_to_ptr.vmem [resolvable:$true] %s31
      %34 = dma.hbm_to_vmem [thread:$0]  %s30, 64, %s32, [#allocation6]
    $region9: #{tpu_custom_call.1} parent=1 // pred_fallthru
      _
    // Predicated region
    $region10: #{tpu_custom_call.1} parent=1 // pred_check
      _
    $region11: #{tpu_custom_call.1} parent=1 // pred_check_branch
      %36 = sbr.rel (0) target = $region13
    $region12: #{tpu_custom_call.1} parent=1 // pred_region
      %38 = vsyncadd [#allocation6], 0
      %s40 = sshll.u32 %s2, 4
      %s41 = int_to_ptr.hbm [resolvable:$true] %s40
      %s42 = sshll.u32 [#allocation7], 4
      %s43 = int_to_ptr.vmem [resolvable:$true] %s42
      %45 = dma.hbm_to_vmem [thread:$0]  %s41, 64, %s43, [#allocation6]
    $region13: #{tpu_custom_call.1} parent=1 // pred_fallthru
      _
    // Predicated region
    $region14: #{tpu_custom_call.1} parent=1 // pred_check
      _
    $region15: #{tpu_custom_call.1} parent=1 // pred_check_branch
      %47 = sbr.rel (0) target = $region17
    $region16: #{tpu_custom_call.1} parent=1 // pred_region
      %49 = dma.done [#allocation3], 1024
    $region17: #{tpu_custom_call.1} parent=1 // pred_fallthru
      _
    // Predicated region
    $region18: #{tpu_custom_call.1} parent=1 // pred_check
      _
    $region19: #{tpu_custom_call.1} parent=1 // pred_check_branch
      %51 = sbr.rel (0) target = $region21
    $region20: #{tpu_custom_call.1} parent=1 // pred_region
      %53 = dma.done [#allocation6], 64
    $region21: #{tpu_custom_call.1} parent=1 // pred_fallthru
      _
    // Predicated region
    $region22: #{tpu_custom_call.1} parent=1 // pred_check
      _
    $region23: #{tpu_custom_call.1} parent=1 // pred_check_branch
      %55 = sbr.rel (0) target = $region25
    $region24: #{tpu_custom_call.1} parent=1 // pred_region
      %57 = dma.done [#allocation6], 64
    $region25: #{tpu_custom_call.1} parent=1 // pred_fallthru
      _
    %v58 = vld [vmem:[#allocation2] sm:$0xff]
    %v59 = vld [vmem:[#allocation2 + $0x8] sm:$0xff]
    %v60 = vld [vmem:[#allocation2 + $0x10] sm:$0xff]
    %v61 = vld [vmem:[#allocation2 + $0x18] sm:$0xff]
    %v62 = vld [vmem:[#allocation2 + $0x20] sm:$0xff]
    %v63 = vld [vmem:[#allocation2 + $0x28] sm:$0xff]
    %v64 = vld [vmem:[#allocation2 + $0x30] sm:$0xff]
    %v65 = vld [vmem:[#allocation2 + $0x38] sm:$0xff]
    %v66 = vadd.f32 %v58, %v62
    %v67 = vrot.slane %v66, 4
    %v68 = vadd.f32 %v66, %v67
    %v69 = vrot.slane %v68, 2
    %v70 = vadd.f32 %v68, %v69
    %v71 = vrot.slane %v70, 1
    %v72 = vadd.f32 %v70, %v71
    %v73 = vadd.f32 %v59, %v63
    %v74 = vrot.slane %v73, 4
    %v75 = vadd.f32 %v73, %v74
    %v76 = vrot.slane %v75, 2
    %v77 = vadd.f32 %v75, %v76
    %v78 = vrot.slane %v77, 1
    %v79 = vadd.f32 %v77, %v78
    %v80 = vadd.f32 %v60, %v64
    %v81 = vrot.slane %v80, 4
    %v82 = vadd.f32 %v80, %v81
    %v83 = vrot.slane %v82, 2
    %v84 = vadd.f32 %v82, %v83
    %v85 = vrot.slane %v84, 1
    %v86 = vadd.f32 %v84, %v85
    %v87 = vadd.f32 %v61, %v65
    %v88 = vrot.slane %v87, 4
    %v89 = vadd.f32 %v87, %v88
    %v90 = vrot.slane %v89, 2
    %v91 = vadd.f32 %v89, %v90
    %v92 = vrot.slane %v91, 1
    %v93 = vadd.f32 %v91, %v92
    %v94 = vrcp.pop 16.0
    %v95 = vmul.f32 16.0, %v94
    %v96 = vsub.f32 1.0, %v95
    %v97 = vmul.f32 %v94, %v96
    %v98 = vadd.f32 %v94, %v97
    %vm99 = vweird.f32 %v94
    %v100 = vsel %vm99, %v94, %v98
    %v101 = vmul.f32 %v72, %v100
    %v102 = vmul.f32 %v79, %v100
    %v103 = vmul.f32 %v86, %v100
    %v104 = vmul.f32 %v93, %v100
    %v105 = vsub.f32 %v58, %v101
    %v106 = vsub.f32 %v59, %v102
    %v107 = vsub.f32 %v60, %v103
    %v108 = vsub.f32 %v61, %v104
    %v109 = vsub.f32 %v62, %v101
    %v110 = vsub.f32 %v63, %v102
    %v111 = vsub.f32 %v64, %v103
    %v112 = vsub.f32 %v65, %v104
    %v113 = vmul.f32 %v105, %v105
    %v114 = vmul.f32 %v106, %v106
    %v115 = vmul.f32 %v107, %v107
    %v116 = vmul.f32 %v108, %v108
    %v117 = vmul.f32 %v109, %v109
    %v118 = vmul.f32 %v110, %v110
    %v119 = vmul.f32 %v111, %v111
    %v120 = vmul.f32 %v112, %v112
    %v121 = vadd.f32 %v113, %v117
    %v122 = vrot.slane %v121, 4
    %v123 = vadd.f32 %v121, %v122
    %v124 = vrot.slane %v123, 2
    %v125 = vadd.f32 %v123, %v124
    %v126 = vrot.slane %v125, 1
    %v127 = vadd.f32 %v125, %v126
    %v128 = vadd.f32 %v114, %v118
    %v129 = vrot.slane %v128, 4
    %v130 = vadd.f32 %v128, %v129
    %v131 = vrot.slane %v130, 2
    %v132 = vadd.f32 %v130, %v131
    %v133 = vrot.slane %v132, 1
    %v134 = vadd.f32 %v132, %v133
    %v135 = vadd.f32 %v115, %v119
    %v136 = vrot.slane %v135, 4
    %v137 = vadd.f32 %v135, %v136
    %v138 = vrot.slane %v137, 2
    %v139 = vadd.f32 %v137, %v138
    %v140 = vrot.slane %v139, 1
    %v141 = vadd.f32 %v139, %v140
    %v142 = vadd.f32 %v116, %v120
    %v143 = vrot.slane %v142, 4
    %v144 = vadd.f32 %v142, %v143
    %v145 = vrot.slane %v144, 2
    %v146 = vadd.f32 %v144, %v145
    %v147 = vrot.slane %v146, 1
    %v148 = vadd.f32 %v146, %v147
    %v149 = vmul.f32 %v127, %v100
    %v150 = vmul.f32 %v134, %v100
    %v151 = vmul.f32 %v141, %v100
    %v152 = vmul.f32 %v148, %v100
    %v153 = vadd.f32 %v149, 1e-05
    %v154 = vadd.f32 %v150, 1e-05
    %v155 = vadd.f32 %v151, 1e-05
    %v156 = vadd.f32 %v152, 1e-05
    %v157 = vrsqrt.pop %v153
    %v158 = vmul.f32 %v157, %v153
    %v159 = vmul.f32 %v158, %v157
    %v160 = vmul.f32 0.5, %v159
    %v161 = vsub.f32 1.5, %v160
    %v162 = vmul.f32 %v157, %v161
    %vm163 = vweird.f32 %v153
    %vm164 = vweird.f32 %v157
    %vm165 = vmor %vm163, %vm164
    %v166 = vsel %vm165, %v157, %v162
    %v167 = vrsqrt.pop %v154
    %v168 = vmul.f32 %v167, %v154
    %v169 = vmul.f32 %v168, %v167
    %v170 = vmul.f32 0.5, %v169
    %v171 = vsub.f32 1.5, %v170
    %v172 = vmul.f32 %v167, %v171
    %vm173 = vweird.f32 %v154
    %vm174 = vweird.f32 %v167
    %vm175 = vmor %vm173, %vm174
    %v176 = vsel %vm175, %v167, %v172
    %v177 = vrsqrt.pop %v155
    %v178 = vmul.f32 %v177, %v155
    %v179 = vmul.f32 %v178, %v177
    %v180 = vmul.f32 0.5, %v179
    %v181 = vsub.f32 1.5, %v180
    %v182 = vmul.f32 %v177, %v181
    %vm183 = vweird.f32 %v155
    %vm184 = vweird.f32 %v177
    %vm185 = vmor %vm183, %vm184
    %v186 = vsel %vm185, %v177, %v182
    %v187 = vrsqrt.pop %v156
    %v188 = vmul.f32 %v187, %v156
    %v189 = vmul.f32 %v188, %v187
    %v190 = vmul.f32 0.5, %v189
    %v191 = vsub.f32 1.5, %v190
    %v192 = vmul.f32 %v187, %v191
    %vm193 = vweird.f32 %v156
    %vm194 = vweird.f32 %v187
    %vm195 = vmor %vm193, %vm194
    %v196 = vsel %vm195, %v187, %v192
    %v197 = vmul.f32 %v105, %v166
    %v198 = vmul.f32 %v106, %v176
    %v199 = vmul.f32 %v107, %v186
    %v200 = vmul.f32 %v108, %v196
    %v201 = vmul.f32 %v109, %v166
    %v202 = vmul.f32 %v110, %v176
    %v203 = vmul.f32 %v111, %v186
    %v204 = vmul.f32 %v112, %v196
    %v205 = vld [vmem:[#allocation5] sm:$0xf]
    %v207 = vperm.slane %v205, 0
    %v208 = vperm.slane %v205, 1
    %v209 = vperm.slane %v205, 2
    %v210 = vperm.slane %v205, 3
    %v215 = vmul.f32 %v197, %v207
    %v216 = vmul.f32 %v198, %v208
    %v217 = vmul.f32 %v199, %v209
    %v218 = vmul.f32 %v200, %v210
    %v219 = vmul.f32 %v201, %v207
    %v220 = vmul.f32 %v202, %v208
    %v221 = vmul.f32 %v203, %v209
    %v222 = vmul.f32 %v204, %v210
    %v223 = vld [vmem:[#allocation7] sm:$0xf]
    %v225 = vperm.slane %v223, 0
    %v226 = vperm.slane %v223, 1
    %v227 = vperm.slane %v223, 2
    %v228 = vperm.slane %v223, 3
    %v233 = vadd.f32 %v215, %v225
    %v234 = vadd.f32 %v216, %v226
    %v235 = vadd.f32 %v217, %v227
    %v236 = vadd.f32 %v218, %v228
    %v237 = vadd.f32 %v219, %v225
    %v238 = vadd.f32 %v220, %v226
    %v239 = vadd.f32 %v221, %v227
    %v240 = vadd.f32 %v222, %v228
    %241 = vst [vmem:[#allocation8] sm:$0xff] %v233
    %242 = vst [vmem:[#allocation8 + $0x8] sm:$0xff] %v234
    %243 = vst [vmem:[#allocation8 + $0x10] sm:$0xff] %v235
    %244 = vst [vmem:[#allocation8 + $0x18] sm:$0xff] %v236
    %245 = vst [vmem:[#allocation8 + $0x20] sm:$0xff] %v237
    %246 = vst [vmem:[#allocation8 + $0x28] sm:$0xff] %v238
    %247 = vst [vmem:[#allocation8 + $0x30] sm:$0xff] %v239
    %248 = vst [vmem:[#allocation8 + $0x38] sm:$0xff] %v240
    // Predicated region
    $region26: #{tpu_custom_call.1} parent=1 // pred_check
      _
    $region27: #{tpu_custom_call.1} parent=1 // pred_check_branch
      %250 = sbr.rel (0) target = $region29
    $region28: #{tpu_custom_call.1} parent=1 // pred_region
      %252 = vsyncadd [#allocation4], 0
      %s253 = sshll.u32 [#allocation8], 4
      %s254 = int_to_ptr.vmem [resolvable:$true] %s253
      %s255 = sshll.u32 %s3, 4
      %s256 = int_to_ptr.hbm [resolvable:$true] %s255
      %261 = dma.vmem_to_hbm [thread:$0]  %s254, 1024, %s256, [#allocation4], 512, 512, 32
    $region29: #{tpu_custom_call.1} parent=1 // pred_fallthru
      _
    // Predicated region
    $region30: #{tpu_custom_call.1} parent=1 // pred_check
      _
    $region31: #{tpu_custom_call.1} parent=1 // pred_check_branch
      %263 = sbr.rel (0) target = $region33
    $region32: #{tpu_custom_call.1} parent=1 // pred_region
      %265 = dma.done [#allocation4], 1024
    $region33: #{tpu_custom_call.1} parent=1 // pred_fallthru
      _
    %266 = vsyncpa [#allocation3], 1
    %267 = vsyncpa [#allocation6], 1
    %268 = vsyncpa [#allocation4], 1

</llo_original>
